<compile_context>
chip_gen: v5e
topology: v5e:2x2
jax: 0.10.0
libtpu: 0.0.40
codegen_flags: <defaults>
</compile_context>

<pallas_src>
import jax
import jax.numpy as jnp
from jax.experimental import pallas as pl
from jax.experimental.pallas import tpu as pltpu


def _bilstm_kernel(gx_ref, whh_ref, h0_ref, c0_ref, out_ref, hn_ref, cn_ref,
                   h_sc, c_sc):
    """One time-tile of the fused bidirectional LSTM recurrence.

    gx_ref  : (Tt, B, 8H) precomputed x@W_ih^T + bias, gate-interleaved
              [i_f,i_b,f_f,f_b,o_f,o_b,g_f,g_b]; backward columns already time-reversed.
    whh_ref : (2H, 8H)    block-diagonal recurrent weights (fwd rows 0:H, bwd rows H:2H).
    h0/c0   : (B, 2H)     [h_f | h_b] initial states.
    out_ref : (T, B, 2H)  final torch layout, VMEM-resident across the time grid.
    hn/cn   : (2, B, H)   final states (written on the last grid step).
    h_sc/c_sc : (B, 2H)   VMEM scratch carrying the recurrent state across grid steps.
    """
    Tt, B, G = gx_ref.shape          # G = 8H
    T = out_ref.shape[0]
    H2 = h0_ref.shape[-1]            # 2H
    H = H2 // 2

    tile = pl.program_id(0)
    n_tiles = pl.num_programs(0)

    @pl.when(tile == 0)
    def _init():
        h_sc[...] = h0_ref[...].astype(jnp.float32)
        c_sc[...] = c0_ref[...].astype(jnp.float32)

    t_base = tile * Tt

    def step(lt, carry):
        h, c = carry                                         # (B, 2H) f32, vreg-resident
        tg = t_base + lt                                     # global (forward) time index
        # W_hh read per step from VMEM (no long-lived 16-vreg copy across the unrolled loop).
        gates = gx_ref[lt] + jnp.dot(h, whh_ref[...],
                                     preferred_element_type=jnp.float32)   # (B, 8H)

        sig = jax.nn.sigmoid(gates[:, :3 * H2])              # [i_f i_b | f_f f_b | o_f o_b]
        g_g = jnp.tanh(gates[:, 3 * H2:])                    # [g_f g_b]
        i_g = sig[:, 0:H2]
        f_g = sig[:, H2:2 * H2]
        o_g = sig[:, 2 * H2:3 * H2]

        c_new = f_g * c + i_g * g_g
        h_new = o_g * jnp.tanh(c_new)

        # Write directly in the final (T, B, 2H) layout:
        #   forward half belongs to time tg, backward half to real time T-1-tg.
        out_ref[tg, :, 0:H] = h_new[:, 0:H].astype(out_ref.dtype)
        out_ref[T - 1 - tg, :, H:H2] = h_new[:, H:H2].astype(out_ref.dtype)
        return h_new, c_new

    h_fin, c_fin = jax.lax.fori_loop(
        0, Tt, step, (h_sc[...], c_sc[...]), unroll=True)    # bounded unroll (Tt steps)

    h_sc[...] = h_fin
    c_sc[...] = c_fin

    @pl.when(tile == n_tiles - 1)
    def _finalize():
        hn_ref[0] = h_fin[:, 0:H].astype(hn_ref.dtype)
        hn_ref[1] = h_fin[:, H:H2].astype(hn_ref.dtype)
        cn_ref[0] = c_fin[:, 0:H].astype(cn_ref.dtype)
        cn_ref[1] = c_fin[:, H:H2].astype(cn_ref.dtype)


def _prepare_combined(params, enc_input):
    """JAX-side prologue.

    The gate interleave is folded into the (tiny) weight matrices: rows of the combined W_ih and
    bias are pre-permuted to [i_f,i_b,f_f,f_b,o_f,o_b,g_f,g_b], so the single big matmul produces
    gx already in kernel layout.  Only one cheap time-reverse of the backward columns remains.
    """
    T, B, F = enc_input.shape
    H = params["hidden_size"]
    # torch weight row blocks are [i, f, g, o]; we want column order i, f, o, g (tanh last).
    gate_seq = (0, 1, 3, 2)

    def rows(w, g):
        return w[g * H:(g + 1) * H]

    # ---- combined input-projection weights: (8H, F), rows [i_f,i_b,f_f,f_b,o_f,o_b,g_f,g_b]
    w_ih_comb = jnp.concatenate(
        [rows(params[name], g) for g in gate_seq for name in ("w_ih_f", "w_ih_b")],
        axis=0)
    b_f = params["b_ih_f"] + params["b_hh_f"]
    b_b = params["b_ih_b"] + params["b_hh_b"]
    b_comb = jnp.concatenate(
        [rows(b, g) for g in gate_seq for b in (b_f, b_b)], axis=0)        # (8H,)

    # ---- one big (T*B, F) x (F, 8H) matmul -> already gate-interleaved, forward time
    gx = (enc_input.reshape(T * B, F) @ w_ih_comb.T + b_comb).reshape(T, B, 4, 2, H)
    # single pass: time-reverse ONLY the backward-direction columns
    gx_comb = jnp.concatenate([gx[:, :, :, :1], gx[::-1, :, :, 1:]], axis=3)
    gx_comb = gx_comb.reshape(T, B, 8 * H)

    # ---- block-diagonal recurrent weights (2H, 8H), same interleaved column order
    zeros = jnp.zeros((H, H), jnp.float32)
    cols = []
    for g in gate_seq:
        cols.append(jnp.concatenate([rows(params["w_hh_f"], g).T, zeros], axis=0))  # fwd col blk
        cols.append(jnp.concatenate([zeros, rows(params["w_hh_b"], g).T], axis=0))  # bwd col blk
    w_hh_comb = jnp.concatenate(cols, axis=1)                                       # (2H, 8H)

    return gx_comb, w_hh_comb


def bilstm_fused(gx_comb, w_hh_comb, h0_comb, c0_comb, *, time_tile=8):
    """Single pallas_call running both LSTM directions with the time axis tiled on the grid."""
    T, B, G = gx_comb.shape          # G = 8H
    H2 = h0_comb.shape[-1]           # 2H
    H = H2 // 2
    Tt = time_tile if (0 < time_tile <= T and T % time_tile == 0) else T
    n_tiles = T // Tt

    out, hn, cn = pl.pallas_call(
        _bilstm_kernel,
        out_shape=(
            jax.ShapeDtypeStruct((T, B, H2), jnp.float32),     # encode_output (final layout)
            jax.ShapeDtypeStruct((2, B, H), jnp.float32),      # h_n
            jax.ShapeDtypeStruct((2, B, H), jnp.float32),      # c_n
        ),
        grid=(n_tiles,),
        in_specs=[
            pl.BlockSpec((Tt, B, G), lambda i: (i, 0, 0)),     # gx tile, double-buffered
            pl.BlockSpec((H2, G), lambda i: (0, 0)),           # block-diag W_hh (resident)
            pl.BlockSpec((B, H2), lambda i: (0, 0)),           # h0 [fwd|bwd]
            pl.BlockSpec((B, H2), lambda i: (0, 0)),           # c0 [fwd|bwd]
        ],
        out_specs=(
            # Output stays VMEM-resident across the sequential time grid (backward rows are
            # written mirror-ordered, so per-tile streaming of a single fused layout isn't
            # expressible with one BlockSpec); DMA'd back once at the end.
            pl.BlockSpec((T, B, H2), lambda i: (0, 0, 0)),
            pl.BlockSpec((2, B, H), lambda i: (0, 0, 0)),
            pl.BlockSpec((2, B, H), lambda i: (0, 0, 0)),
        ),
        scratch_shapes=[
            pltpu.VMEM((B, H2), jnp.float32),                  # h carry across grid steps
            pltpu.VMEM((B, H2), jnp.float32),                  # c carry across grid steps
        ],
        compiler_params=pltpu.CompilerParams(
            dimension_semantics=("arbitrary",),                # recurrence: strictly sequential
            vmem_limit_bytes=32 * 1024 * 1024),
    )(gx_comb, w_hh_comb, h0_comb, c0_comb)
    return out, hn, cn


def encoder_forward(params, enc_input, key, *, time_tile=8):
    """Mirrors Encoder.forward: random h_0/c_0, bidirectional LSTM, returns
    (encode_output, (h_n, c_n)) plus the sampled (h_0, c_0) for verification."""
    T, B, F = enc_input.shape
    H = params["hidden_size"]

    k_h, k_c = jax.random.split(key)
    h_0 = jax.random.uniform(k_h, (2, B, H), jnp.float32)   # torch.rand equivalent
    c_0 = jax.random.uniform(k_c, (2, B, H), jnp.float32)

    gx_comb, w_hh_comb = _prepare_combined(params, enc_input)
    h0_comb = jnp.concatenate([h_0[0], h_0[1]], axis=-1)     # (B, 2H)
    c0_comb = jnp.concatenate([c_0[0], c_0[1]], axis=-1)

    encode_output, h_n, c_n = bilstm_fused(
        gx_comb, w_hh_comb, h0_comb, c0_comb, time_tile=time_tile)
    return encode_output, (h_n, c_n), (h_0, c_0)


# ---------------- pure-JAX reference (for correctness check) ----------------
def _lstm_ref_dir(x, w_ih, w_hh, b_ih, b_hh, h0, c0, reverse):
    H = h0.shape[-1]
    xs = x[::-1] if reverse else x

    def step(carry, x_t):
        h, c = carry
        g = x_t @ w_ih.T + h @ w_hh.T + b_ih + b_hh
        i = jax.nn.sigmoid(g[:, :H])
        f = jax.nn.sigmoid(g[:, H:2 * H])
        gg = jnp.tanh(g[:, 2 * H:3 * H])
        o = jax.nn.sigmoid(g[:, 3 * H:])
        c = f * c + i * gg
        h = o * jnp.tanh(c)
        return (h, c), h

    (hn, cn), ys = jax.lax.scan(step, (h0, c0), xs)
    if reverse:
        ys = ys[::-1]
    return ys, hn, cn


def init_params(key, in_features, hidden_size):
    """Deterministic PyTorch-style init: U(-1/sqrt(H), 1/sqrt(H))."""
    bound = 1.0 / jnp.sqrt(hidden_size)
    keys = jax.random.split(key, 8)
    u = lambda k, shape: jax.random.uniform(k, shape, jnp.float32, -bound, bound)
    return {
        "hidden_size": hidden_size,
        "w_ih_f": u(keys[0], (4 * hidden_size, in_features)),
        "w_hh_f": u(keys[1], (4 * hidden_size, hidden_size)),
        "b_ih_f": u(keys[2], (4 * hidden_size,)),
        "b_hh_f": u(keys[3], (4 * hidden_size,)),
        "w_ih_b": u(keys[4], (4 * hidden_size, in_features)),
        "w_hh_b": u(keys[5], (4 * hidden_size, hidden_size)),
        "b_ih_b": u(keys[6], (4 * hidden_size,)),
        "b_hh_b": u(keys[7], (4 * hidden_size,)),
    }


if __name__ == "__main__":
    SEQ, BATCH, IN_FEATURES, HIDDEN = 8, 4, 16, 32
    TIME_TILE = 4     # grid=(2,): exercises the cross-tile h/c scratch carry

    root = jax.random.PRNGKey(0)
    k_param, k_input, k_state = jax.random.split(root, 3)

    params = init_params(k_param, IN_FEATURES, HIDDEN)
    enc_input = jax.random.normal(k_input, (SEQ, BATCH, IN_FEATURES), jnp.float32)

    encode_output, (encode_ht, decode_ht), (h_0, c_0) = encoder_forward(
        params, enc_input, k_state, time_tile=TIME_TILE)
    jax.block_until_ready((encode_output, encode_ht, decode_ht))

    # shape checks vs. nn.LSTM(bidirectional=True, num_layers=1)
    assert encode_output.shape == (SEQ, BATCH, 2 * HIDDEN)
    assert encode_ht.shape == (2, BATCH, HIDDEN)
    assert decode_ht.shape == (2, BATCH, HIDDEN)

    # numerical check against pure-JAX lax.scan reference
    of, hf, cf = _lstm_ref_dir(enc_input, params["w_ih_f"], params["w_hh_f"],
                               params["b_ih_f"], params["b_hh_f"],
                               h_0[0], c_0[0], reverse=False)
    ob, hb, cb = _lstm_ref_dir(enc_input, params["w_ih_b"], params["w_hh_b"],
                               params["b_ih_b"], params["b_hh_b"],
                               h_0[1], c_0[1], reverse=True)
    ref_out = jnp.concatenate([of, ob], axis=-1)
    ref_hn = jnp.stack([hf, hb], axis=0)
    ref_cn = jnp.stack([cf, cb], axis=0)

    assert jnp.allclose(encode_output, ref_out, rtol=2e-3, atol=2e-3)
    assert jnp.allclose(encode_ht, ref_hn, rtol=2e-3, atol=2e-3)   # h_n
    assert jnp.allclose(decode_ht, ref_cn, rtol=2e-3, atol=2e-3)   # c_n (torch returns (h_n, c_n))

    print("KERNEL_OK")
</pallas_src>

<mosaic_0001>
module attributes {stable_mosaic.version = 11 : i64} {
  func.func @_bilstm_kernel(%arg0: i32, %arg1: memref<4x4x256xf32, #tpu.memory_space<vmem>>, %arg2: memref<64x256xf32, #tpu.memory_space<vmem>>, %arg3: memref<4x64xf32, #tpu.memory_space<vmem>>, %arg4: memref<4x64xf32, #tpu.memory_space<vmem>>, %arg5: memref<8x4x64xf32, #tpu.memory_space<vmem>>, %arg6: memref<2x4x32xf32, #tpu.memory_space<vmem>>, %arg7: memref<2x4x32xf32, #tpu.memory_space<vmem>>, %arg8: memref<4x64xf32, #tpu.memory_space<vmem>>, %arg9: memref<4x64xf32, #tpu.memory_space<vmem>>) attributes {dimension_semantics = [#tpu.dimension_semantics<arbitrary>], iteration_bounds = array<i64: 2>, scalar_prefetch = 0 : i64, scratch_operands = 2 : i64, tpu.core_type = #tpu.core_type<tc>, window_params = [{transform_indices = @transform_0, window_bounds = array<i64: 4, 4, 256>}, {pipeline_mode = #tpu.pipeline_mode<synchronous>, transform_indices = @transform_1, window_bounds = array<i64: 64, 256>}, {pipeline_mode = #tpu.pipeline_mode<synchronous>, transform_indices = @transform_2, window_bounds = array<i64: 4, 64>}, {pipeline_mode = #tpu.pipeline_mode<synchronous>, transform_indices = @transform_3, window_bounds = array<i64: 4, 64>}, {pipeline_mode = #tpu.pipeline_mode<synchronous>, transform_indices = @transform_4, window_bounds = array<i64: 8, 4, 64>}, {pipeline_mode = #tpu.pipeline_mode<synchronous>, transform_indices = @transform_5, window_bounds = array<i64: 2, 4, 32>}, {pipeline_mode = #tpu.pipeline_mode<synchronous>, transform_indices = @transform_6, window_bounds = array<i64: 2, 4, 32>}]} {
    %c0_i32 = arith.constant 0 : i32
    %0 = arith.cmpi eq, %arg0, %c0_i32 : i32
    %1 = arith.extui %0 : i1 to i32
    %c0_i32_0 = arith.constant 0 : i32
    %2 = arith.cmpi ne, %1, %c0_i32_0 : i32
    scf.if %2 {
      %c0_53 = arith.constant 0 : index
      %c0_54 = arith.constant 0 : index
      %147 = vector.load %arg3[%c0_53, %c0_54] : memref<4x64xf32, #tpu.memory_space<vmem>>, vector<4x64xf32>
      %c0_55 = arith.constant 0 : index
      %c0_56 = arith.constant 0 : index
      %148 = vector.load %arg8[%c0_55, %c0_56] : memref<4x64xf32, #tpu.memory_space<vmem>>, vector<4x64xf32>
      tpu.vector_store %arg8[%c0_55, %c0_56], %147 {strides = array<i32>} : memref<4x64xf32, #tpu.memory_space<vmem>>, vector<4x64xf32>,
      %c0_57 = arith.constant 0 : index
      %c0_58 = arith.constant 0 : index
      %149 = vector.load %arg4[%c0_57, %c0_58] : memref<4x64xf32, #tpu.memory_space<vmem>>, vector<4x64xf32>
      %c0_59 = arith.constant 0 : index
      %c0_60 = arith.constant 0 : index
      %150 = vector.load %arg9[%c0_59, %c0_60] : memref<4x64xf32, #tpu.memory_space<vmem>>, vector<4x64xf32>
      tpu.vector_store %arg9[%c0_59, %c0_60], %149 {strides = array<i32>} : memref<4x64xf32, #tpu.memory_space<vmem>>, vector<4x64xf32>,
    } else {
    }
    %c4_i32 = arith.constant 4 : i32
    %3 = arith.muli %arg0, %c4_i32 : i32
    %c0 = arith.constant 0 : index
    %c0_1 = arith.constant 0 : index
    %4 = vector.load %arg8[%c0, %c0_1] : memref<4x64xf32, #tpu.memory_space<vmem>>, vector<4x64xf32>
    %c0_2 = arith.constant 0 : index
    %c0_3 = arith.constant 0 : index
    %5 = vector.load %arg9[%c0_2, %c0_3] : memref<4x64xf32, #tpu.memory_space<vmem>>, vector<4x64xf32>
    %c0_i32_4 = arith.constant 0 : i32
    %6 = arith.addi %3, %c0_i32_4 : i32
    %7 = arith.index_cast %c0_i32_4 : i32 to index
    %c0_5 = arith.constant 0 : index
    %c0_6 = arith.constant 0 : index
    %8 = vector.load %arg1[%7, %c0_5, %c0_6] : memref<4x4x256xf32, #tpu.memory_space<vmem>>, vector<1x4x256xf32>
    %9 = vector.shape_cast %8 : vector<1x4x256xf32> to vector<4x256xf32>
    %c0_7 = arith.constant 0 : index
    %c0_8 = arith.constant 0 : index
    %10 = vector.load %arg2[%c0_7, %c0_8] : memref<64x256xf32, #tpu.memory_space<vmem>>, vector<64x256xf32>
    %cst = arith.constant dense<0.000000e+00> : vector<4x256xf32>
    %11 = tpu.matmul %4, %10, %cst {dimension_numbers = #tpu.dot_dimension_numbers<[1], [0], [0], [1], [0, 0, 1, 1], [], []>} : vector<4x64xf32>, vector<64x256xf32>, vector<4x256xf32> -> vector<4x256xf32>
    %12 = arith.addf %9, %11 : vector<4x256xf32>
    %13 = vector.extract_strided_slice %12 {offsets = [0, 0], sizes = [4, 192], strides = [1, 1]} : vector<4x256xf32> to vector<4x192xf32>
    %14 = arith.negf %13 : vector<4x192xf32>
    %15 = math.exp %14 : vector<4x192xf32>
    %cst_9 = arith.constant 1.000000e+00 : f32
    %16 = vector.broadcast %cst_9 : f32 to vector<4x192xf32>
    %17 = arith.addf %16, %15 : vector<4x192xf32>
    %18 = arith.divf %16, %17 : vector<4x192xf32>
    %19 = vector.extract_strided_slice %12 {offsets = [0, 192], sizes = [4, 64], strides = [1, 1]} : vector<4x256xf32> to vector<4x64xf32>
    %20 = math.tanh %19 : vector<4x64xf32>
    %21 = vector.extract_strided_slice %18 {offsets = [0, 0], sizes = [4, 64], strides = [1, 1]} : vector<4x192xf32> to vector<4x64xf32>
    %22 = vector.extract_strided_slice %18 {offsets = [0, 64], sizes = [4, 64], strides = [1, 1]} : vector<4x192xf32> to vector<4x64xf32>
    %23 = vector.extract_strided_slice %18 {offsets = [0, 128], sizes = [4, 64], strides = [1, 1]} : vector<4x192xf32> to vector<4x64xf32>
    %24 = arith.mulf %22, %5 : vector<4x64xf32>
    %25 = arith.mulf %21, %20 : vector<4x64xf32>
    %26 = arith.addf %24, %25 : vector<4x64xf32>
    %27 = math.tanh %26 : vector<4x64xf32>
    %28 = arith.mulf %23, %27 : vector<4x64xf32>
    %29 = vector.extract_strided_slice %28 {offsets = [0, 0], sizes = [4, 32], strides = [1, 1]} : vector<4x64xf32> to vector<4x32xf32>
    %30 = arith.index_cast %6 : i32 to index
    %c0_10 = arith.constant 0 : index
    %c0_11 = arith.constant 0 : index
    %31 = vector.load %arg5[%30, %c0_10, %c0_11] : memref<8x4x64xf32, #tpu.memory_space<vmem>>, vector<1x4x32xf32>
    %32 = vector.shape_cast %31 : vector<1x4x32xf32> to vector<4x32xf32>
    %33 = vector.shape_cast %29 : vector<4x32xf32> to vector<1x4x32xf32>
    tpu.vector_store %arg5[%30, %c0_10, %c0_11], %33 {strides = array<i32>} : memref<8x4x64xf32, #tpu.memory_space<vmem>>, vector<1x4x32xf32>,
    %34 = vector.extract_strided_slice %28 {offsets = [0, 32], sizes = [4, 32], strides = [1, 1]} : vector<4x64xf32> to vector<4x32xf32>
    %c7_i32 = arith.constant 7 : i32
    %35 = arith.subi %c7_i32, %6 : i32
    %36 = arith.index_cast %35 : i32 to index
    %c0_12 = arith.constant 0 : index
    %c32 = arith.constant 32 : index
    %37 = vector.load %arg5[%36, %c0_12, %c32] : memref<8x4x64xf32, #tpu.memory_space<vmem>>, vector<1x4x32xf32>
    %38 = vector.shape_cast %37 : vector<1x4x32xf32> to vector<4x32xf32>
    %39 = vector.shape_cast %34 : vector<4x32xf32> to vector<1x4x32xf32>
    tpu.vector_store %arg5[%36, %c0_12, %c32], %39 {strides = array<i32>} : memref<8x4x64xf32, #tpu.memory_space<vmem>>, vector<1x4x32xf32>,
    %c1_i32 = arith.constant 1 : i32
    %40 = arith.addi %3, %c1_i32 : i32
    %41 = arith.index_cast %c1_i32 : i32 to index
    %c0_13 = arith.constant 0 : index
    %c0_14 = arith.constant 0 : index
    %42 = vector.load %arg1[%41, %c0_13, %c0_14] : memref<4x4x256xf32, #tpu.memory_space<vmem>>, vector<1x4x256xf32>
    %43 = vector.shape_cast %42 : vector<1x4x256xf32> to vector<4x256xf32>
    %c0_15 = arith.constant 0 : index
    %c0_16 = arith.constant 0 : index
    %44 = vector.load %arg2[%c0_15, %c0_16] : memref<64x256xf32, #tpu.memory_space<vmem>>, vector<64x256xf32>
    %cst_17 = arith.constant dense<0.000000e+00> : vector<4x256xf32>
    %45 = tpu.matmul %28, %44, %cst_17 {dimension_numbers = #tpu.dot_dimension_numbers<[1], [0], [0], [1], [0, 0, 1, 1], [], []>} : vector<4x64xf32>, vector<64x256xf32>, vector<4x256xf32> -> vector<4x256xf32>
    %46 = arith.addf %43, %45 : vector<4x256xf32>
    %47 = vector.extract_strided_slice %46 {offsets = [0, 0], sizes = [4, 192], strides = [1, 1]} : vector<4x256xf32> to vector<4x192xf32>
    %48 = arith.negf %47 : vector<4x192xf32>
    %49 = math.exp %48 : vector<4x192xf32>
    %cst_18 = arith.constant 1.000000e+00 : f32
    %50 = vector.broadcast %cst_18 : f32 to vector<4x192xf32>
    %51 = arith.addf %50, %49 : vector<4x192xf32>
    %52 = arith.divf %50, %51 : vector<4x192xf32>
    %53 = vector.extract_strided_slice %46 {offsets = [0, 192], sizes = [4, 64], strides = [1, 1]} : vector<4x256xf32> to vector<4x64xf32>
    %54 = math.tanh %53 : vector<4x64xf32>
    %55 = vector.extract_strided_slice %52 {offsets = [0, 0], sizes = [4, 64], strides = [1, 1]} : vector<4x192xf32> to vector<4x64xf32>
    %56 = vector.extract_strided_slice %52 {offsets = [0, 64], sizes = [4, 64], strides = [1, 1]} : vector<4x192xf32> to vector<4x64xf32>
    %57 = vector.extract_strided_slice %52 {offsets = [0, 128], sizes = [4, 64], strides = [1, 1]} : vector<4x192xf32> to vector<4x64xf32>
    %58 = arith.mulf %56, %26 : vector<4x64xf32>
    %59 = arith.mulf %55, %54 : vector<4x64xf32>
    %60 = arith.addf %58, %59 : vector<4x64xf32>
    %61 = math.tanh %60 : vector<4x64xf32>
    %62 = arith.mulf %57, %61 : vector<4x64xf32>
    %63 = vector.extract_strided_slice %62 {offsets = [0, 0], sizes = [4, 32], strides = [1, 1]} : vector<4x64xf32> to vector<4x32xf32>
    %64 = arith.index_cast %40 : i32 to index
    %c0_19 = arith.constant 0 : index
    %c0_20 = arith.constant 0 : index
    %65 = vector.load %arg5[%64, %c0_19, %c0_20] : memref<8x4x64xf32, #tpu.memory_space<vmem>>, vector<1x4x32xf32>
    %66 = vector.shape_cast %65 : vector<1x4x32xf32> to vector<4x32xf32>
    %67 = vector.shape_cast %63 : vector<4x32xf32> to vector<1x4x32xf32>
    tpu.vector_store %arg5[%64, %c0_19, %c0_20], %67 {strides = array<i32>} : memref<8x4x64xf32, #tpu.memory_space<vmem>>, vector<1x4x32xf32>,
    %68 = vector.extract_strided_slice %62 {offsets = [0, 32], sizes = [4, 32], strides = [1, 1]} : vector<4x64xf32> to vector<4x32xf32>
    %c7_i32_21 = arith.constant 7 : i32
    %69 = arith.subi %c7_i32_21, %40 : i32
    %70 = arith.index_cast %69 : i32 to index
    %c0_22 = arith.constant 0 : index
    %c32_23 = arith.constant 32 : index
    %71 = vector.load %arg5[%70, %c0_22, %c32_23] : memref<8x4x64xf32, #tpu.memory_space<vmem>>, vector<1x4x32xf32>
    %72 = vector.shape_cast %71 : vector<1x4x32xf32> to vector<4x32xf32>
    %73 = vector.shape_cast %68 : vector<4x32xf32> to vector<1x4x32xf32>
    tpu.vector_store %arg5[%70, %c0_22, %c32_23], %73 {strides = array<i32>} : memref<8x4x64xf32, #tpu.memory_space<vmem>>, vector<1x4x32xf32>,
    %c2_i32 = arith.constant 2 : i32
    %74 = arith.addi %3, %c2_i32 : i32
    %75 = arith.index_cast %c2_i32 : i32 to index
    %c0_24 = arith.constant 0 : index
    %c0_25 = arith.constant 0 : index
    %76 = vector.load %arg1[%75, %c0_24, %c0_25] : memref<4x4x256xf32, #tpu.memory_space<vmem>>, vector<1x4x256xf32>
    %77 = vector.shape_cast %76 : vector<1x4x256xf32> to vector<4x256xf32>
    %c0_26 = arith.constant 0 : index
    %c0_27 = arith.constant 0 : index
    %78 = vector.load %arg2[%c0_26, %c0_27] : memref<64x256xf32, #tpu.memory_space<vmem>>, vector<64x256xf32>
    %cst_28 = arith.constant dense<0.000000e+00> : vector<4x256xf32>
    %79 = tpu.matmul %62, %78, %cst_28 {dimension_numbers = #tpu.dot_dimension_numbers<[1], [0], [0], [1], [0, 0, 1, 1], [], []>} : vector<4x64xf32>, vector<64x256xf32>, vector<4x256xf32> -> vector<4x256xf32>
    %80 = arith.addf %77, %79 : vector<4x256xf32>
    %81 = vector.extract_strided_slice %80 {offsets = [0, 0], sizes = [4, 192], strides = [1, 1]} : vector<4x256xf32> to vector<4x192xf32>
    %82 = arith.negf %81 : vector<4x192xf32>
    %83 = math.exp %82 : vector<4x192xf32>
    %cst_29 = arith.constant 1.000000e+00 : f32
    %84 = vector.broadcast %cst_29 : f32 to vector<4x192xf32>
    %85 = arith.addf %84, %83 : vector<4x192xf32>
    %86 = arith.divf %84, %85 : vector<4x192xf32>
    %87 = vector.extract_strided_slice %80 {offsets = [0, 192], sizes = [4, 64], strides = [1, 1]} : vector<4x256xf32> to vector<4x64xf32>
    %88 = math.tanh %87 : vector<4x64xf32>
    %89 = vector.extract_strided_slice %86 {offsets = [0, 0], sizes = [4, 64], strides = [1, 1]} : vector<4x192xf32> to vector<4x64xf32>
    %90 = vector.extract_strided_slice %86 {offsets = [0, 64], sizes = [4, 64], strides = [1, 1]} : vector<4x192xf32> to vector<4x64xf32>
    %91 = vector.extract_strided_slice %86 {offsets = [0, 128], sizes = [4, 64], strides = [1, 1]} : vector<4x192xf32> to vector<4x64xf32>
    %92 = arith.mulf %90, %60 : vector<4x64xf32>
    %93 = arith.mulf %89, %88 : vector<4x64xf32>
    %94 = arith.addf %92, %93 : vector<4x64xf32>
    %95 = math.tanh %94 : vector<4x64xf32>
    %96 = arith.mulf %91, %95 : vector<4x64xf32>
    %97 = vector.extract_strided_slice %96 {offsets = [0, 0], sizes = [4, 32], strides = [1, 1]} : vector<4x64xf32> to vector<4x32xf32>
    %98 = arith.index_cast %74 : i32 to index
    %c0_30 = arith.constant 0 : index
    %c0_31 = arith.constant 0 : index
    %99 = vector.load %arg5[%98, %c0_30, %c0_31] : memref<8x4x64xf32, #tpu.memory_space<vmem>>, vector<1x4x32xf32>
    %100 = vector.shape_cast %99 : vector<1x4x32xf32> to vector<4x32xf32>
    %101 = vector.shape_cast %97 : vector<4x32xf32> to vector<1x4x32xf32>
    tpu.vector_store %arg5[%98, %c0_30, %c0_31], %101 {strides = array<i32>} : memref<8x4x64xf32, #tpu.memory_space<vmem>>, vector<1x4x32xf32>,
    %102 = vector.extract_strided_slice %96 {offsets = [0, 32], sizes = [4, 32], strides = [1, 1]} : vector<4x64xf32> to vector<4x32xf32>
    %c7_i32_32 = arith.constant 7 : i32
    %103 = arith.subi %c7_i32_32, %74 : i32
    %104 = arith.index_cast %103 : i32 to index
    %c0_33 = arith.constant 0 : index
    %c32_34 = arith.constant 32 : index
    %105 = vector.load %arg5[%104, %c0_33, %c32_34] : memref<8x4x64xf32, #tpu.memory_space<vmem>>, vector<1x4x32xf32>
    %106 = vector.shape_cast %105 : vector<1x4x32xf32> to vector<4x32xf32>
    %107 = vector.shape_cast %102 : vector<4x32xf32> to vector<1x4x32xf32>
    tpu.vector_store %arg5[%104, %c0_33, %c32_34], %107 {strides = array<i32>} : memref<8x4x64xf32, #tpu.memory_space<vmem>>, vector<1x4x32xf32>,
    %c3_i32 = arith.constant 3 : i32
    %108 = arith.addi %3, %c3_i32 : i32
    %109 = arith.index_cast %c3_i32 : i32 to index
    %c0_35 = arith.constant 0 : index
    %c0_36 = arith.constant 0 : index
    %110 = vector.load %arg1[%109, %c0_35, %c0_36] : memref<4x4x256xf32, #tpu.memory_space<vmem>>, vector<1x4x256xf32>
    %111 = vector.shape_cast %110 : vector<1x4x256xf32> to vector<4x256xf32>
    %c0_37 = arith.constant 0 : index
    %c0_38 = arith.constant 0 : index
    %112 = vector.load %arg2[%c0_37, %c0_38] : memref<64x256xf32, #tpu.memory_space<vmem>>, vector<64x256xf32>
    %cst_39 = arith.constant dense<0.000000e+00> : vector<4x256xf32>
    %113 = tpu.matmul %96, %112, %cst_39 {dimension_numbers = #tpu.dot_dimension_numbers<[1], [0], [0], [1], [0, 0, 1, 1], [], []>} : vector<4x64xf32>, vector<64x256xf32>, vector<4x256xf32> -> vector<4x256xf32>
    %114 = arith.addf %111, %113 : vector<4x256xf32>
    %115 = vector.extract_strided_slice %114 {offsets = [0, 0], sizes = [4, 192], strides = [1, 1]} : vector<4x256xf32> to vector<4x192xf32>
    %116 = arith.negf %115 : vector<4x192xf32>
    %117 = math.exp %116 : vector<4x192xf32>
    %cst_40 = arith.constant 1.000000e+00 : f32
    %118 = vector.broadcast %cst_40 : f32 to vector<4x192xf32>
    %119 = arith.addf %118, %117 : vector<4x192xf32>
    %120 = arith.divf %118, %119 : vector<4x192xf32>
    %121 = vector.extract_strided_slice %114 {offsets = [0, 192], sizes = [4, 64], strides = [1, 1]} : vector<4x256xf32> to vector<4x64xf32>
    %122 = math.tanh %121 : vector<4x64xf32>
    %123 = vector.extract_strided_slice %120 {offsets = [0, 0], sizes = [4, 64], strides = [1, 1]} : vector<4x192xf32> to vector<4x64xf32>
    %124 = vector.extract_strided_slice %120 {offsets = [0, 64], sizes = [4, 64], strides = [1, 1]} : vector<4x192xf32> to vector<4x64xf32>
    %125 = vector.extract_strided_slice %120 {offsets = [0, 128], sizes = [4, 64], strides = [1, 1]} : vector<4x192xf32> to vector<4x64xf32>
    %126 = arith.mulf %124, %94 : vector<4x64xf32>
    %127 = arith.mulf %123, %122 : vector<4x64xf32>
    %128 = arith.addf %126, %127 : vector<4x64xf32>
    %129 = math.tanh %128 : vector<4x64xf32>
    %130 = arith.mulf %125, %129 : vector<4x64xf32>
    %131 = vector.extract_strided_slice %130 {offsets = [0, 0], sizes = [4, 32], strides = [1, 1]} : vector<4x64xf32> to vector<4x32xf32>
    %132 = arith.index_cast %108 : i32 to index
    %c0_41 = arith.constant 0 : index
    %c0_42 = arith.constant 0 : index
    %133 = vector.load %arg5[%132, %c0_41, %c0_42] : memref<8x4x64xf32, #tpu.memory_space<vmem>>, vector<1x4x32xf32>
    %134 = vector.shape_cast %133 : vector<1x4x32xf32> to vector<4x32xf32>
    %135 = vector.shape_cast %131 : vector<4x32xf32> to vector<1x4x32xf32>
    tpu.vector_store %arg5[%132, %c0_41, %c0_42], %135 {strides = array<i32>} : memref<8x4x64xf32, #tpu.memory_space<vmem>>, vector<1x4x32xf32>,
    %136 = vector.extract_strided_slice %130 {offsets = [0, 32], sizes = [4, 32], strides = [1, 1]} : vector<4x64xf32> to vector<4x32xf32>
    %c7_i32_43 = arith.constant 7 : i32
    %137 = arith.subi %c7_i32_43, %108 : i32
    %138 = arith.index_cast %137 : i32 to index
    %c0_44 = arith.constant 0 : index
    %c32_45 = arith.constant 32 : index
    %139 = vector.load %arg5[%138, %c0_44, %c32_45] : memref<8x4x64xf32, #tpu.memory_space<vmem>>, vector<1x4x32xf32>
    %140 = vector.shape_cast %139 : vector<1x4x32xf32> to vector<4x32xf32>
    %141 = vector.shape_cast %136 : vector<4x32xf32> to vector<1x4x32xf32>
    tpu.vector_store %arg5[%138, %c0_44, %c32_45], %141 {strides = array<i32>} : memref<8x4x64xf32, #tpu.memory_space<vmem>>, vector<1x4x32xf32>,
    %c4_i32_46 = arith.constant 4 : i32
    %c0_47 = arith.constant 0 : index
    %c0_48 = arith.constant 0 : index
    %142 = vector.load %arg8[%c0_47, %c0_48] : memref<4x64xf32, #tpu.memory_space<vmem>>, vector<4x64xf32>
    tpu.vector_store %arg8[%c0_47, %c0_48], %130 {strides = array<i32>} : memref<4x64xf32, #tpu.memory_space<vmem>>, vector<4x64xf32>,
    %c0_49 = arith.constant 0 : index
    %c0_50 = arith.constant 0 : index
    %143 = vector.load %arg9[%c0_49, %c0_50] : memref<4x64xf32, #tpu.memory_space<vmem>>, vector<4x64xf32>
    tpu.vector_store %arg9[%c0_49, %c0_50], %128 {strides = array<i32>} : memref<4x64xf32, #tpu.memory_space<vmem>>, vector<4x64xf32>,
    %c1_i32_51 = arith.constant 1 : i32
    %144 = arith.cmpi eq, %arg0, %c1_i32_51 : i32
    %145 = arith.extui %144 : i1 to i32
    %c0_i32_52 = arith.constant 0 : i32
    %146 = arith.cmpi ne, %145, %c0_i32_52 : i32
    scf.if %146 {
      %147 = vector.extract_strided_slice %130 {offsets = [0, 0], sizes = [4, 32], strides = [1, 1]} : vector<4x64xf32> to vector<4x32xf32>
      %c0_53 = arith.constant 0 : index
      %c0_54 = arith.constant 0 : index
      %c0_55 = arith.constant 0 : index
      %148 = vector.load %arg6[%c0_53, %c0_54, %c0_55] : memref<2x4x32xf32, #tpu.memory_space<vmem>>, vector<1x4x32xf32>
      %149 = vector.shape_cast %148 : vector<1x4x32xf32> to vector<4x32xf32>
      %150 = vector.shape_cast %147 : vector<4x32xf32> to vector<1x4x32xf32>
      tpu.vector_store %arg6[%c0_53, %c0_54, %c0_55], %150 {strides = array<i32>} : memref<2x4x32xf32, #tpu.memory_space<vmem>>, vector<1x4x32xf32>,
      %151 = vector.extract_strided_slice %130 {offsets = [0, 32], sizes = [4, 32], strides = [1, 1]} : vector<4x64xf32> to vector<4x32xf32>
      %c1 = arith.constant 1 : index
      %c0_56 = arith.constant 0 : index
      %c0_57 = arith.constant 0 : index
      %152 = vector.load %arg6[%c1, %c0_56, %c0_57] : memref<2x4x32xf32, #tpu.memory_space<vmem>>, vector<1x4x32xf32>
      %153 = vector.shape_cast %152 : vector<1x4x32xf32> to vector<4x32xf32>
      %154 = vector.shape_cast %151 : vector<4x32xf32> to vector<1x4x32xf32>
      tpu.vector_store %arg6[%c1, %c0_56, %c0_57], %154 {strides = array<i32>} : memref<2x4x32xf32, #tpu.memory_space<vmem>>, vector<1x4x32xf32>,
      %155 = vector.extract_strided_slice %128 {offsets = [0, 0], sizes = [4, 32], strides = [1, 1]} : vector<4x64xf32> to vector<4x32xf32>
      %c0_58 = arith.constant 0 : index
      %c0_59 = arith.constant 0 : index
      %c0_60 = arith.constant 0 : index
      %156 = vector.load %arg7[%c0_58, %c0_59, %c0_60] : memref<2x4x32xf32, #tpu.memory_space<vmem>>, vector<1x4x32xf32>
      %157 = vector.shape_cast %156 : vector<1x4x32xf32> to vector<4x32xf32>
      %158 = vector.shape_cast %155 : vector<4x32xf32> to vector<1x4x32xf32>
      tpu.vector_store %arg7[%c0_58, %c0_59, %c0_60], %158 {strides = array<i32>} : memref<2x4x32xf32, #tpu.memory_space<vmem>>, vector<1x4x32xf32>,
      %159 = vector.extract_strided_slice %128 {offsets = [0, 32], sizes = [4, 32], strides = [1, 1]} : vector<4x64xf32> to vector<4x32xf32>
      %c1_61 = arith.constant 1 : index
      %c0_62 = arith.constant 0 : index
      %c0_63 = arith.constant 0 : index
      %160 = vector.load %arg7[%c1_61, %c0_62, %c0_63] : memref<2x4x32xf32, #tpu.memory_space<vmem>>, vector<1x4x32xf32>
      %161 = vector.shape_cast %160 : vector<1x4x32xf32> to vector<4x32xf32>
      %162 = vector.shape_cast %159 : vector<4x32xf32> to vector<1x4x32xf32>
      tpu.vector_store %arg7[%c1_61, %c0_62, %c0_63], %162 {strides = array<i32>} : memref<2x4x32xf32, #tpu.memory_space<vmem>>, vector<1x4x32xf32>,
    } else {
    }
    return
  }
  func.func @transform_0(%arg0: i32) -> (i32, i32, i32) {
    %c0_i32 = arith.constant 0 : i32
    %c0_i32_0 = arith.constant 0 : i32
    %c0_i32_1 = arith.constant 0 : i32
    return %arg0, %c0_i32, %c0_i32_0 : i32, i32, i32
  }
  func.func @transform_1(%arg0: i32) -> (i32, i32) {
    %c0_i32 = arith.constant 0 : i32
    %c0_i32_0 = arith.constant 0 : i32
    %c0_i32_1 = arith.constant 0 : i32
    return %c0_i32, %c0_i32_0 : i32, i32
  }
  func.func @transform_2(%arg0: i32) -> (i32, i32) {
    %c0_i32 = arith.constant 0 : i32
    %c0_i32_0 = arith.constant 0 : i32
    %c0_i32_1 = arith.constant 0 : i32
    return %c0_i32, %c0_i32_0 : i32, i32
  }
  func.func @transform_3(%arg0: i32) -> (i32, i32) {
    %c0_i32 = arith.constant 0 : i32
    %c0_i32_0 = arith.constant 0 : i32
    %c0_i32_1 = arith.constant 0 : i32
    return %c0_i32, %c0_i32_0 : i32, i32
  }
  func.func @transform_4(%arg0: i32) -> (i32, i32, i32) {
    %c0_i32 = arith.constant 0 : i32
    %c0_i32_0 = arith.constant 0 : i32
    %c0_i32_1 = arith.constant 0 : i32
    %c0_i32_2 = arith.constant 0 : i32
    return %c0_i32, %c0_i32_0, %c0_i32_1 : i32, i32, i32
  }
  func.func @transform_5(%arg0: i32) -> (i32, i32, i32) {
    %c0_i32 = arith.constant 0 : i32
    %c0_i32_0 = arith.constant 0 : i32
    %c0_i32_1 = arith.constant 0 : i32
    %c0_i32_2 = arith.constant 0 : i32
    return %c0_i32, %c0_i32_0, %c0_i32_1 : i32, i32, i32
  }
  func.func @transform_6(%arg0: i32) -> (i32, i32, i32) {
    %c0_i32 = arith.constant 0 : i32
    %c0_i32_0 = arith.constant 0 : i32
    %c0_i32_1 = arith.constant 0 : i32
    %c0_i32_2 = arith.constant 0 : i32
    return %c0_i32, %c0_i32_0, %c0_i32_1 : i32, i32, i32
  }
}

</mosaic_0001>

<llo_original>
// kernel: tpu_custom_call.1
$region0: #{tpu_custom_call.1}
  #allocation0 [shape = 'u32[]', space=smem, size = 0x4, offset = 0x4, fixed_abs, tag = 'smem constant byte address 0x4 - core index']
  #allocation1 [shape = 'u32[72,128]{1,0:T(1,128)}', space=vmem, size = 0x9000, scoped, tag = 'internal scratch']
  #allocation2 [shape = 'f32[4,64]{1,0:T(4,128)}', space=vmem, size = 0x800, scoped, tag = 'scratch operand']
  #allocation3 [shape = 'f32[4,64]{1,0:T(4,128)}', space=vmem, size = 0x800, scoped, tag = 'scratch operand']
  %s0 = inlined_call_operand.hbm [shape: f32[8,4,256], index: 0, kind: input, shape index: {}]
  %s1 = inlined_call_operand.hbm [shape: f32[64,256], index: 1, kind: input, shape index: {}]
  %s2 = inlined_call_operand.hbm [shape: f32[4,64], index: 2, kind: input, shape index: {}]
  %s3 = inlined_call_operand.hbm [shape: f32[4,64], index: 3, kind: input, shape index: {}]
  %s4 = inlined_call_operand.hbm [shape: f32[8,4,64], index: 4, kind: output, shape index: {0}]
  %s5 = inlined_call_operand.hbm [shape: f32[2,4,32], index: 5, kind: output, shape index: {1}]
  %s6 = inlined_call_operand.hbm [shape: f32[2,4,32], index: 6, kind: output, shape index: {2}]
  %7 = xla_tuple %s4, %s5, %s6
  %s8 = sld [smem:[#allocation0]]
  $region89: #{tpu_custom_call.1} parent=0
    _
  %s10 = ssub.s32 1, %s8
  %s11 = scalar_select 0, %s10, %s8
  $region1: #{tpu_custom_call.1} parent=0
    #allocation4 [shape = 'u8[32768]{0}', space=vmem, size = 0x8000, scoped, tag = 'input window, operand 0']
    #allocation5 [shape = 's32[2]{0}', space=sflag, size = 0x8, scoped, tag = 'scoped memory for tpu_custom_call.1']
    #allocation6 [shape = 's32[2]{0}', space=sflag, size = 0x8, scoped, tag = 'scoped memory for tpu_custom_call.1']
    #allocation7 [shape = 'u8[65536]{0}', space=vmem, size = 0x10000, scoped, tag = 'input window, operand 1, single buffered']
    #allocation8 [shape = 's32[1]{0}', space=sflag, size = 0x4, scoped, tag = 'scoped memory for tpu_custom_call.1']
    #allocation9 [shape = 'u8[2048]{0}', space=vmem, size = 0x800, scoped, tag = 'input window, operand 2, single buffered']
    #allocation10 [shape = 'u8[2048]{0}', space=vmem, size = 0x800, scoped, tag = 'input window, operand 3, single buffered']
    #allocation11 [shape = 's32[1]{0}', space=sflag, size = 0x4, scoped, tag = 'scoped memory for tpu_custom_call.1']
    #allocation12 [shape = 'u8[16384]{0}', space=vmem, size = 0x4000, scoped, tag = 'output window, operand 0, single buffered']
    #allocation13 [shape = 'u8[4096]{0}', space=vmem, size = 0x1000, scoped, tag = 'output window, operand 1, single buffered']
    #allocation14 [shape = 's32[1]{0}', space=sflag, size = 0x4, scoped, tag = 'scoped memory for tpu_custom_call.1']
    #allocation15 [shape = 'u8[4096]{0}', space=vmem, size = 0x1000, scoped, tag = 'output window, operand 2, single buffered']
    %12 = vsyncpa [#allocation5], 0
    %s13 = scalar_lea.sflag [#allocation5], 1
    %14 = vsyncpa %s13, 0
    %15 = vsyncpa [#allocation8], 0
    %16 = vsyncpa [#allocation11], 0
    %17 = vsyncpa [#allocation6], 0
    %18 = vsyncpa [#allocation14], 0
    loop: start=0, step=1, limit=4
    $region2: #{tpu_custom_call.1} parent=1 // loop_pre_header
      _
    $region3: #{tpu_custom_call.1} parent=1 // loop_header
      %s20 = sphi 0, %s24
      %p21 = scmp.ge.s32.totalorder %s20, 4
      %s30 = sphi 0, %s32
      %s33 = sphi 0, %s30
      %s34 = sphi 0, %s33
      %s50 = sphi 0, %s34
      %s54 = sphi 0, %s54
      %s56 = sphi 0, %s54
      %s57 = sphi 0, %s56
      %s71 = sphi 0, %s57
      %s75 = sphi 0, %s75
      %s77 = sphi 0, %s75
      %s78 = sphi 0, %s77
      %s92 = sphi 0, %s78
      %s96 = sphi 0, %s96
      %s98 = sphi 0, %s96
      %s99 = sphi 0, %s98
      %s113 = sphi 0, %s99
      %s117 = sphi 0, %s117
      %s119 = sphi 0, %s117
      %s120 = sphi 0, %s119
      %s134 = sphi 0, %s120
      %s138 = sphi 0, %s138
      %s140 = sphi 0, %s138
      %s141 = sphi 0, %s140
      %s155 = sphi 0, %s141
      %s159 = sphi 0, %s159
      %s161 = sphi 0, %s159
      %s162 = sphi 0, %s161
      %s176 = sphi 0, %s162
    $region4: #{tpu_custom_call.1} parent=1 // loop_header_branch
      %23 = sbr.rel (%p21) target = $region8
    $region5: #{tpu_custom_call.1} parent=1 // loop_body
      %s25 = ssub.s32 %s20, 1
      %s26 = ssub.s32 %s20, 2
      %s27 = sadd.s32 %s20, 1
      %s28 = ssub.s32 %s20, %s27
      %p29 = scmp.eq.s32.totalorder %s28, 0
      %s31 = sadd.s32 %s30, 1
      %s32 = scalar_select %p29, %s30, %s31
      %p35 = pneg %p29
      %p36 = scmp.eq.s32.totalorder %s20, 1
      %p37 = por %p35, %p36
      %p38 = scmp.ne.s32.totalorder %s30, %s33
      %p39 = scmp.eq.s32.totalorder %s20, 0
      %p40 = por %p38, %p39
      %p41 = scmp.ne.s32.totalorder %s30, %s33
      %p42 = scmp.eq.s32.totalorder %s25, 1
      %p43 = por %p41, %p42
      %p44 = scmp.ne.s32.totalorder %s33, %s34
      %p45 = scmp.eq.s32.totalorder %s25, 0
      %p46 = por %p44, %p45
      %p47 = scmp.ne.s32.totalorder %s33, %s34
      %p48 = scmp.eq.s32.totalorder %s26, 1
      %p49 = por %p47, %p48
      %p51 = scmp.ne.s32.totalorder %s34, %s50
      %p52 = scmp.eq.s32.totalorder %s26, 0
      %p53 = por %p51, %p52
      %s55 = sadd.s32 %s54, 1
      %p58 = scmp.eq.s32.totalorder %s20, 1
      %p59 = scmp.ne.s32.totalorder %s54, %s56
      %p60 = scmp.eq.s32.totalorder %s20, 0
      %p61 = por %p59, %p60
      %p62 = scmp.ne.s32.totalorder %s54, %s56
      %p63 = scmp.eq.s32.totalorder %s25, 1
      %p64 = por %p62, %p63
      %p65 = scmp.ne.s32.totalorder %s56, %s57
      %p66 = scmp.eq.s32.totalorder %s25, 0
      %p67 = por %p65, %p66
      %p68 = scmp.ne.s32.totalorder %s56, %s57
      %p69 = scmp.eq.s32.totalorder %s26, 1
      %p70 = por %p68, %p69
      %p72 = scmp.ne.s32.totalorder %s57, %s71
      %p73 = scmp.eq.s32.totalorder %s26, 0
      %p74 = por %p72, %p73
      %s76 = sadd.s32 %s75, 1
      %p79 = scmp.eq.s32.totalorder %s20, 1
      %p80 = scmp.ne.s32.totalorder %s75, %s77
      %p81 = scmp.eq.s32.totalorder %s20, 0
      %p82 = por %p80, %p81
      %p83 = scmp.ne.s32.totalorder %s75, %s77
      %p84 = scmp.eq.s32.totalorder %s25, 1
      %p85 = por %p83, %p84
      %p86 = scmp.ne.s32.totalorder %s77, %s78
      %p87 = scmp.eq.s32.totalorder %s25, 0
      %p88 = por %p86, %p87
      %p89 = scmp.ne.s32.totalorder %s77, %s78
      %p90 = scmp.eq.s32.totalorder %s26, 1
      %p91 = por %p89, %p90
      %p93 = scmp.ne.s32.totalorder %s78, %s92
      %p94 = scmp.eq.s32.totalorder %s26, 0
      %p95 = por %p93, %p94
      %s97 = sadd.s32 %s96, 1
      %p100 = scmp.eq.s32.totalorder %s20, 1
      %p101 = scmp.ne.s32.totalorder %s96, %s98
      %p102 = scmp.eq.s32.totalorder %s20, 0
      %p103 = por %p101, %p102
      %p104 = scmp.ne.s32.totalorder %s96, %s98
      %p105 = scmp.eq.s32.totalorder %s25, 1
      %p106 = por %p104, %p105
      %p107 = scmp.ne.s32.totalorder %s98, %s99
      %p108 = scmp.eq.s32.totalorder %s25, 0
      %p109 = por %p107, %p108
      %p110 = scmp.ne.s32.totalorder %s98, %s99
      %p111 = scmp.eq.s32.totalorder %s26, 1
      %p112 = por %p110, %p111
      %p114 = scmp.ne.s32.totalorder %s99, %s113
      %p115 = scmp.eq.s32.totalorder %s26, 0
      %p116 = por %p114, %p115
      %s118 = sadd.s32 %s117, 1
      %p121 = scmp.eq.s32.totalorder %s20, 1
      %p122 = scmp.ne.s32.totalorder %s117, %s119
      %p123 = scmp.eq.s32.totalorder %s20, 0
      %p124 = por %p122, %p123
      %p125 = scmp.ne.s32.totalorder %s117, %s119
      %p126 = scmp.eq.s32.totalorder %s25, 1
      %p127 = por %p125, %p126
      %p128 = scmp.ne.s32.totalorder %s119, %s120
      %p129 = scmp.eq.s32.totalorder %s25, 0
      %p130 = por %p128, %p129
      %p131 = scmp.ne.s32.totalorder %s119, %s120
      %p132 = scmp.eq.s32.totalorder %s26, 1
      %p133 = por %p131, %p132
      %p135 = scmp.ne.s32.totalorder %s120, %s134
      %p136 = scmp.eq.s32.totalorder %s26, 0
      %p137 = por %p135, %p136
      %s139 = sadd.s32 %s138, 1
      %p142 = scmp.eq.s32.totalorder %s20, 1
      %p143 = scmp.ne.s32.totalorder %s138, %s140
      %p144 = scmp.eq.s32.totalorder %s20, 0
      %p145 = por %p143, %p144
      %p146 = scmp.ne.s32.totalorder %s138, %s140
      %p147 = scmp.eq.s32.totalorder %s25, 1
      %p148 = por %p146, %p147
      %p149 = scmp.ne.s32.totalorder %s140, %s141
      %p150 = scmp.eq.s32.totalorder %s25, 0
      %p151 = por %p149, %p150
      %p152 = scmp.ne.s32.totalorder %s140, %s141
      %p153 = scmp.eq.s32.totalorder %s26, 1
      %p154 = por %p152, %p153
      %p156 = scmp.ne.s32.totalorder %s141, %s155
      %p157 = scmp.eq.s32.totalorder %s26, 0
      %p158 = por %p156, %p157
      %s160 = sadd.s32 %s159, 1
      %p163 = scmp.eq.s32.totalorder %s20, 1
      %p164 = scmp.ne.s32.totalorder %s159, %s161
      %p165 = scmp.eq.s32.totalorder %s20, 0
      %p166 = por %p164, %p165
      %p167 = scmp.ne.s32.totalorder %s159, %s161
      %p168 = scmp.eq.s32.totalorder %s25, 1
      %p169 = por %p167, %p168
      %p170 = scmp.ne.s32.totalorder %s161, %s162
      %p171 = scmp.eq.s32.totalorder %s25, 0
      %p172 = por %p170, %p171
      %p173 = scmp.ne.s32.totalorder %s161, %s162
      %p174 = scmp.eq.s32.totalorder %s26, 1
      %p175 = por %p173, %p174
      %p177 = scmp.ne.s32.totalorder %s162, %s176
      %p178 = scmp.eq.s32.totalorder %s26, 0
      %p179 = por %p177, %p178
      %p180 = scmp.le.s32.totalorder 1, %s20
      %p181 = scmp.lt.s32.totalorder %s20, 3
      %p182 = pnand %p180, %p181
      %p183 = pneg %p182
      // Predicated region
      $region9: #{tpu_custom_call.1} parent=5 // pred_check
        _
      $region10: #{tpu_custom_call.1} parent=5 // pred_check_branch
        %185 = sbr.rel (%p182) target = $region12
      $region11: #{tpu_custom_call.1} parent=5 // pred_region
        %s186 = ssub.s32 %s20, 1
        // Predicated region
        $region13: #{tpu_custom_call.1} parent=11 // pred_check
          %p187 = pneg %p67
        $region14: #{tpu_custom_call.1} parent=11 // pred_check_branch
          %189 = sbr.rel (%p187) target = $region16
        $region15: #{tpu_custom_call.1} parent=11 // pred_region
          %191 = vsyncadd [#allocation8], 0
          %s192 = sshll.u32 %s1, 4
          %s193 = int_to_ptr.hbm [resolvable:$true] %s192
          %s194 = sshll.u32 [#allocation7], 4
          %s195 = int_to_ptr.vmem [resolvable:$true] %s194
          %200 = dma.hbm_to_vmem [thread:$0]  %s193, 2048, %s195, [#allocation8], 256, 256, 16
        $region16: #{tpu_custom_call.1} parent=11 // pred_fallthru
          _
        // Predicated region
        $region17: #{tpu_custom_call.1} parent=11 // pred_check
          %p201 = pneg %p88
        $region18: #{tpu_custom_call.1} parent=11 // pred_check_branch
          %203 = sbr.rel (%p201) target = $region20
        $region19: #{tpu_custom_call.1} parent=11 // pred_region
          %205 = vsyncadd [#allocation8], 0
          %s207 = sshll.u32 %s2, 4
          %s208 = int_to_ptr.hbm [resolvable:$true] %s207
          %s209 = sshll.u32 [#allocation9], 4
          %s210 = int_to_ptr.vmem [resolvable:$true] %s209
          %212 = dma.hbm_to_vmem [thread:$0]  %s208, 64, %s210, [#allocation8]
        $region20: #{tpu_custom_call.1} parent=11 // pred_fallthru
          _
        // Predicated region
        $region21: #{tpu_custom_call.1} parent=11 // pred_check
          %p213 = pneg %p109
        $region22: #{tpu_custom_call.1} parent=11 // pred_check_branch
          %215 = sbr.rel (%p213) target = $region24
        $region23: #{tpu_custom_call.1} parent=11 // pred_region
          %217 = vsyncadd [#allocation11], 0
          %s219 = sshll.u32 %s3, 4
          %s220 = int_to_ptr.hbm [resolvable:$true] %s219
          %s221 = sshll.u32 [#allocation10], 4
          %s222 = int_to_ptr.vmem [resolvable:$true] %s221
          %224 = dma.hbm_to_vmem [thread:$0]  %s220, 64, %s222, [#allocation11]
        $region24: #{tpu_custom_call.1} parent=11 // pred_fallthru
          _
      $region12: #{tpu_custom_call.1} parent=5 // pred_fallthru
        _
      %p225 = scmp.lt.s32.totalorder %s20, 2
      // Predicated region
      $region25: #{tpu_custom_call.1} parent=5 // pred_check
        %p226 = pneg %p225
      $region26: #{tpu_custom_call.1} parent=5 // pred_check_branch
        %228 = sbr.rel (%p226) target = $region28
      $region27: #{tpu_custom_call.1} parent=5 // pred_region
        // Predicated region
        $region29: #{tpu_custom_call.1} parent=27 // pred_check
          %p229 = pneg %p40
        $region30: #{tpu_custom_call.1} parent=27 // pred_check_branch
          %231 = sbr.rel (%p229) target = $region32
        $region31: #{tpu_custom_call.1} parent=27 // pred_region
          %s232 = sand.u32 %s30, 1
          %s233 = scalar_lea.sflag [#allocation5], %s232
          %s234 = sand.u32 %s30, 1
          %s235 = smul.addr %s234, 32
          %s236 = scalar_lea.vmem [#allocation4], %s235
          %s237 = smul.u32 4, %s20
          %239 = vsyncadd %s233, 0
          %s240 = smul.addr %s237, 2
          %s241 = smul.addr %s240, 4
          %s242 = scalar_lea.hbm %s0, %s241
          %s243 = sshll.u32 %s242, 4
          %s244 = int_to_ptr.hbm [resolvable:$true] %s243
          %s245 = sshll.u32 %s236, 4
          %s246 = int_to_ptr.vmem [resolvable:$true] %s245
          %251 = dma.hbm_to_vmem [thread:$0]  %s244, 512, %s246, %s233, 128, 128, 8
        $region32: #{tpu_custom_call.1} parent=27 // pred_fallthru
          _
      $region28: #{tpu_custom_call.1} parent=5 // pred_fallthru
        _
      %p252 = scmp.le.s32.totalorder 1, %s20
      %p253 = scmp.lt.s32.totalorder %s20, 3
      %p254 = pnand %p252, %p253
      %p255 = pneg %p254
      // Predicated region
      $region33: #{tpu_custom_call.1} parent=5 // pred_check
        _
      $region34: #{tpu_custom_call.1} parent=5 // pred_check_branch
        %257 = sbr.rel (%p254) target = $region36
      $region35: #{tpu_custom_call.1} parent=5 // pred_region
        %s258 = ssub.s32 %s20, 1
        %s259 = sand.u32 %s33, 1
        %s260 = scalar_lea.sflag [#allocation5], %s259
        %s261 = sand.u32 %s33, 1
        %s262 = smul.addr %s261, 32
        %s263 = scalar_lea.vmem [#allocation4], %s262
        // Predicated region
        $region37: #{tpu_custom_call.1} parent=35 // pred_check
          %p264 = pneg %p46
        $region38: #{tpu_custom_call.1} parent=35 // pred_check_branch
          %266 = sbr.rel (%p264) target = $region40
        $region39: #{tpu_custom_call.1} parent=35 // pred_region
          %268 = dma.done %s260, 512
        $region40: #{tpu_custom_call.1} parent=35 // pred_fallthru
          _
        // Predicated region
        $region41: #{tpu_custom_call.1} parent=35 // pred_check
          %p269 = pneg %p67
        $region42: #{tpu_custom_call.1} parent=35 // pred_check_branch
          %271 = sbr.rel (%p269) target = $region44
        $region43: #{tpu_custom_call.1} parent=35 // pred_region
          %273 = dma.done [#allocation8], 2048
        $region44: #{tpu_custom_call.1} parent=35 // pred_fallthru
          _
        // Predicated region
        $region45: #{tpu_custom_call.1} parent=35 // pred_check
          %p274 = pneg %p88
        $region46: #{tpu_custom_call.1} parent=35 // pred_check_branch
          %276 = sbr.rel (%p274) target = $region48
        $region47: #{tpu_custom_call.1} parent=35 // pred_region
          %278 = dma.done [#allocation8], 64
        $region48: #{tpu_custom_call.1} parent=35 // pred_fallthru
          _
        // Predicated region
        $region49: #{tpu_custom_call.1} parent=35 // pred_check
          %p279 = pneg %p109
        $region50: #{tpu_custom_call.1} parent=35 // pred_check_branch
          %281 = sbr.rel (%p279) target = $region52
        $region51: #{tpu_custom_call.1} parent=35 // pred_region
          %283 = dma.done [#allocation11], 64
        $region52: #{tpu_custom_call.1} parent=35 // pred_fallthru
          _
        %s284 = sand.u32 %s33, 1
        %s285 = scalar_lea.sflag [#allocation5], %s284
        %s286 = sand.u32 %s33, 1
        %s287 = smul.addr %s286, 32
        %s288 = scalar_lea.vmem [#allocation4], %s287
        %p289 = pneg %p46
        %p290 = pneg %p43
        %p291 = pneg %p67
        %p292 = pneg %p64
        %p293 = pneg %p88
        %p294 = pneg %p85
        %p295 = pneg %p109
        %p296 = pneg %p106
        %p297 = pneg %p130
        %p298 = pneg %p127
        %p299 = pneg %p151
        %p300 = pneg %p148
        %p301 = pneg %p172
        %p302 = pneg %p169
        %s303 = smul.u32 4, %s25
        %p304 = scmp.eq.s32.totalorder %s25, 0
        // Predicated region
        $region53: #{tpu_custom_call.1} parent=35 // pred_check
          %p305 = pneg %p304
        $region54: #{tpu_custom_call.1} parent=35 // pred_check_branch
          %307 = sbr.rel (%p305) target = $region56
        $region55: #{tpu_custom_call.1} parent=35 // pred_region
          %v308 = vld [vmem:[#allocation9] sm:$0xf]
          %vm309 = vcmask 519168
          %310 = vst.msk [vmem:[#allocation2] sm:$0xf] %vm309, %v308
          %v311 = vld [vmem:[#allocation10] sm:$0xf]
          %312 = vst.msk [vmem:[#allocation3] sm:$0xf] %vm309, %v311
        $region56: #{tpu_custom_call.1} parent=35 // pred_fallthru
          _
        %s313 = smul.u32 %s25, 4
        %v314 = vld [vmem:[#allocation2] sm:$0xf]
        %v315 = vld [vmem:[#allocation3] sm:$0xf]
        %v316 = vld [vmem:[%s263] sm:$0xff]
        %v317 = vld [vmem:[#allocation7] sm:$0xff]
        %v318 = vld [vmem:[#allocation7 + $0x8] sm:$0xff]
        %v319 = vld [vmem:[#allocation7 + $0x10] sm:$0xff]
        %v320 = vld [vmem:[#allocation7 + $0x18] sm:$0xff]
        %v321 = vld [vmem:[#allocation7 + $0x20] sm:$0xff]
        %v322 = vld [vmem:[#allocation7 + $0x28] sm:$0xff]
        %v323 = vld [vmem:[#allocation7 + $0x30] sm:$0xff]
        %v324 = vld [vmem:[#allocation7 + $0x38] sm:$0xff]
        %v325 = vld [vmem:[#allocation7 + $0x40] sm:$0xff]
        %v326 = vld [vmem:[#allocation7 + $0x48] sm:$0xff]
        %v327 = vld [vmem:[#allocation7 + $0x50] sm:$0xff]
        %v328 = vld [vmem:[#allocation7 + $0x58] sm:$0xff]
        %v329 = vld [vmem:[#allocation7 + $0x60] sm:$0xff]
        %v330 = vld [vmem:[#allocation7 + $0x68] sm:$0xff]
        %v331 = vld [vmem:[#allocation7 + $0x70] sm:$0xff]
        %v332 = vld [vmem:[#allocation7 + $0x78] sm:$0xff]
        %vm333 = vcmask 523264
        %v335 = vsel %vm333, %v314, 0
        %337 = vmatpush.msra.mxu0 0.0
        %338 = vmatpush.msra.mxu0 0.0
        %339 = vmatpush.msra.mxu0 0.0
        %340 = vmatpush.msra.mxu0 0.0
        %341 = vmatpush.msra.mxu0 0.0
        %342 = vmatpush.msra.mxu0 0.0
        %343 = vmatpush.msra.mxu0 0.0
        %344 = vmatpush.msra.mxu0 0.0
        %345 = vmatpush.msra.mxu0 %v331
        %346 = vmatpush.msra.mxu0 %v329
        %347 = vmatpush.msra.mxu0 %v327
        %348 = vmatpush.msra.mxu0 %v325
        %349 = vmatpush.msra.mxu0 %v323
        %350 = vmatpush.msra.mxu0 %v321
        %351 = vmatpush.msra.mxu0 %v319
        %352 = vmatpush.msra.mxu0 %v317
        %353 = vmatmul.f32.gmra.mxu0 %v335
        %v354 = vpop.f32.mrf.mxu0
        %v355 = vadd.f32 0.0, %v354
        %356 = vdwg.mxu0
        %357 = vmatpush.msra.mxu0 0.0
        %358 = vmatpush.msra.mxu0 0.0
        %359 = vmatpush.msra.mxu0 0.0
        %360 = vmatpush.msra.mxu0 0.0
        %361 = vmatpush.msra.mxu0 0.0
        %362 = vmatpush.msra.mxu0 0.0
        %363 = vmatpush.msra.mxu0 0.0
        %364 = vmatpush.msra.mxu0 0.0
        %365 = vmatpush.msra.mxu0 %v332
        %366 = vmatpush.msra.mxu0 %v330
        %367 = vmatpush.msra.mxu0 %v328
        %368 = vmatpush.msra.mxu0 %v326
        %369 = vmatpush.msra.mxu0 %v324
        %370 = vmatpush.msra.mxu0 %v322
        %371 = vmatpush.msra.mxu0 %v320
        %372 = vmatpush.msra.mxu0 %v318
        %373 = vmatmul.f32.gmra.mxu0 %v335
        %v374 = vpop.f32.mrf.mxu0
        %v375 = vadd.f32 0.0, %v374
        %376 = vdwg.mxu0
        %v379 = vrot.slane %v375, 4
        %vm380 = vcmask 1043456
        %v381 = vsel %vm380, %v355, %v379
        %v383 = vadd.f32 %v316, %v381
        %v384 = vxor.u32 %v383, 2147483648
        %v385 = vmul.f32 %v384, 1.442695
        %v386 = vpow.pop %v385
        %v387 = vadd.f32 %v386, 1.0
        %v388 = vrcp.pop %v387
        %v389 = vmul.f32 %v387, %v388
        %v390 = vsub.f32 1.0, %v389
        %v391 = vmul.f32 %v388, %v390
        %v392 = vadd.f32 %v388, %v391
        %vm393 = vweird.f32 %v387
        %vm394 = vweird.f32 %v388
        %vm395 = vmor %vm393, %vm394
        %v396 = vsel %vm395, %v388, %v392
        %v397 = vand.u32 2147483647, %v387
        %vm398 = vcmp.eq.f32.partialorder %v397, 8.507059e+37
        %v399 = vand.u32 %v387, 2147483648
        %v400 = vor.u32 1.1754944e-38, %v399
        %v401 = vsel %vm398, %v400, %v396
        %v402 = vmul.f32 1.0, %v401
        %404 = vrot.lane.b32.xlu0 %v383, 64
        %v405 = vpop.permute.xlu0 %404
        %v406 = vrot.slane %v405, 4
        %v408 = vtanh.pop %v406
        %410 = vrot.lane.b32.xlu0 %v315, 64
        %v411 = vpop.permute.xlu0 %410
        %v413 = vmul.f32 %v402, %v411
        %v414 = vmul.f32 %v402, %v408
        %416 = vrot.lane.b32.xlu0 %v414, 64
        %v417 = vpop.permute.xlu0 %416
        %v419 = vadd.f32 %v413, %v417
        %v420 = vtanh.pop %v419
        %v422 = vrot.slane %v402, 4
        %425 = vrot.lane.b32.xlu0 %v420, 64
        %v426 = vpop.permute.xlu0 %425
        %v428 = vmul.f32 %v422, %v426
        %s429 = smul.u32 %s313, 4
        %s430 = scalar_lea.vmem [#allocation12], %s429
        %vm431 = vcmask 257024
        %432 = vst.msk [vmem:[%s430] sm:$0xf] %vm431, %v428
        %s433 = ssub.s32 7, %s313
        %s434 = smul.u32 %s433, 4
        %s435 = scalar_lea.vmem [#allocation12], %s434
        %vm436 = vcmask 519424
        %437 = vst.msk [vmem:[%s435] sm:$0xf] %vm436, %v428
        %s438 = sadd.s32 %s313, 1
        %s439 = scalar_lea.vmem %s263, 8 [#allocation4]
        %v440 = vld [vmem:[%s439] sm:$0xff]
        %v441 = vld [vmem:[#allocation7] sm:$0xff]
        %v442 = vld [vmem:[#allocation7 + $0x8] sm:$0xff]
        %v443 = vld [vmem:[#allocation7 + $0x10] sm:$0xff]
        %v444 = vld [vmem:[#allocation7 + $0x18] sm:$0xff]
        %v445 = vld [vmem:[#allocation7 + $0x20] sm:$0xff]
        %v446 = vld [vmem:[#allocation7 + $0x28] sm:$0xff]
        %v447 = vld [vmem:[#allocation7 + $0x30] sm:$0xff]
        %v448 = vld [vmem:[#allocation7 + $0x38] sm:$0xff]
        %v449 = vld [vmem:[#allocation7 + $0x40] sm:$0xff]
        %v450 = vld [vmem:[#allocation7 + $0x48] sm:$0xff]
        %v451 = vld [vmem:[#allocation7 + $0x50] sm:$0xff]
        %v452 = vld [vmem:[#allocation7 + $0x58] sm:$0xff]
        %v453 = vld [vmem:[#allocation7 + $0x60] sm:$0xff]
        %v454 = vld [vmem:[#allocation7 + $0x68] sm:$0xff]
        %v455 = vld [vmem:[#allocation7 + $0x70] sm:$0xff]
        %v456 = vld [vmem:[#allocation7 + $0x78] sm:$0xff]
        %v458 = vsel %vm333, %v428, 0
        %460 = vmatpush.msra.mxu0 0.0
        %461 = vmatpush.msra.mxu0 0.0
        %462 = vmatpush.msra.mxu0 0.0
        %463 = vmatpush.msra.mxu0 0.0
        %464 = vmatpush.msra.mxu0 0.0
        %465 = vmatpush.msra.mxu0 0.0
        %466 = vmatpush.msra.mxu0 0.0
        %467 = vmatpush.msra.mxu0 0.0
        %468 = vmatpush.msra.mxu0 %v455
        %469 = vmatpush.msra.mxu0 %v453
        %470 = vmatpush.msra.mxu0 %v451
        %471 = vmatpush.msra.mxu0 %v449
        %472 = vmatpush.msra.mxu0 %v447
        %473 = vmatpush.msra.mxu0 %v445
        %474 = vmatpush.msra.mxu0 %v443
        %475 = vmatpush.msra.mxu0 %v441
        %476 = vmatmul.f32.gmra.mxu0 %v458
        %v477 = vpop.f32.mrf.mxu0
        %v478 = vadd.f32 0.0, %v477
        %479 = vdwg.mxu0
        %480 = vmatpush.msra.mxu0 0.0
        %481 = vmatpush.msra.mxu0 0.0
        %482 = vmatpush.msra.mxu0 0.0
        %483 = vmatpush.msra.mxu0 0.0
        %484 = vmatpush.msra.mxu0 0.0
        %485 = vmatpush.msra.mxu0 0.0
        %486 = vmatpush.msra.mxu0 0.0
        %487 = vmatpush.msra.mxu0 0.0
        %488 = vmatpush.msra.mxu0 %v456
        %489 = vmatpush.msra.mxu0 %v454
        %490 = vmatpush.msra.mxu0 %v452
        %491 = vmatpush.msra.mxu0 %v450
        %492 = vmatpush.msra.mxu0 %v448
        %493 = vmatpush.msra.mxu0 %v446
        %494 = vmatpush.msra.mxu0 %v444
        %495 = vmatpush.msra.mxu0 %v442
        %496 = vmatmul.f32.gmra.mxu0 %v458
        %v497 = vpop.f32.mrf.mxu0
        %v498 = vadd.f32 0.0, %v497
        %499 = vdwg.mxu0
        %v502 = vrot.slane %v498, 4
        %v503 = vsel %vm380, %v478, %v502
        %v505 = vadd.f32 %v440, %v503
        %v506 = vxor.u32 %v505, 2147483648
        %v507 = vmul.f32 %v506, 1.442695
        %v508 = vpow.pop %v507
        %v509 = vadd.f32 %v508, 1.0
        %v510 = vrcp.pop %v509
        %v511 = vmul.f32 %v509, %v510
        %v512 = vsub.f32 1.0, %v511
        %v513 = vmul.f32 %v510, %v512
        %v514 = vadd.f32 %v510, %v513
        %vm515 = vweird.f32 %v509
        %vm516 = vweird.f32 %v510
        %vm517 = vmor %vm515, %vm516
        %v518 = vsel %vm517, %v510, %v514
        %v519 = vand.u32 2147483647, %v509
        %vm520 = vcmp.eq.f32.partialorder %v519, 8.507059e+37
        %v521 = vand.u32 %v509, 2147483648
        %v522 = vor.u32 1.1754944e-38, %v521
        %v523 = vsel %vm520, %v522, %v518
        %v524 = vmul.f32 1.0, %v523
        %526 = vrot.lane.b32.xlu0 %v505, 64
        %v527 = vpop.permute.xlu0 %526
        %v528 = vrot.slane %v527, 4
        %v530 = vtanh.pop %v528
        %v531 = vmul.f32 %v524, %v419
        %v532 = vmul.f32 %v524, %v530
        %534 = vrot.lane.b32.xlu0 %v532, 64
        %v535 = vpop.permute.xlu0 %534
        %v537 = vadd.f32 %v531, %v535
        %v538 = vtanh.pop %v537
        %v540 = vrot.slane %v524, 4
        %543 = vrot.lane.b32.xlu0 %v538, 64
        %v544 = vpop.permute.xlu0 %543
        %v546 = vmul.f32 %v540, %v544
        %s547 = smul.u32 %s438, 4
        %s548 = scalar_lea.vmem [#allocation12], %s547
        %549 = vst.msk [vmem:[%s548] sm:$0xf] %vm431, %v546
        %s550 = ssub.s32 6, %s313
        %s551 = smul.u32 %s550, 4
        %s552 = scalar_lea.vmem [#allocation12], %s551
        %553 = vst.msk [vmem:[%s552] sm:$0xf] %vm436, %v546
        %s554 = sadd.s32 %s313, 2
        %s555 = scalar_lea.vmem %s263, 16 [#allocation4]
        %v556 = vld [vmem:[%s555] sm:$0xff]
        %v557 = vld [vmem:[#allocation7] sm:$0xff]
        %v558 = vld [vmem:[#allocation7 + $0x8] sm:$0xff]
        %v559 = vld [vmem:[#allocation7 + $0x10] sm:$0xff]
        %v560 = vld [vmem:[#allocation7 + $0x18] sm:$0xff]
        %v561 = vld [vmem:[#allocation7 + $0x20] sm:$0xff]
        %v562 = vld [vmem:[#allocation7 + $0x28] sm:$0xff]
        %v563 = vld [vmem:[#allocation7 + $0x30] sm:$0xff]
        %v564 = vld [vmem:[#allocation7 + $0x38] sm:$0xff]
        %v565 = vld [vmem:[#allocation7 + $0x40] sm:$0xff]
        %v566 = vld [vmem:[#allocation7 + $0x48] sm:$0xff]
        %v567 = vld [vmem:[#allocation7 + $0x50] sm:$0xff]
        %v568 = vld [vmem:[#allocation7 + $0x58] sm:$0xff]
        %v569 = vld [vmem:[#allocation7 + $0x60] sm:$0xff]
        %v570 = vld [vmem:[#allocation7 + $0x68] sm:$0xff]
        %v571 = vld [vmem:[#allocation7 + $0x70] sm:$0xff]
        %v572 = vld [vmem:[#allocation7 + $0x78] sm:$0xff]
        %v574 = vsel %vm333, %v546, 0
        %576 = vmatpush.msra.mxu0 0.0
        %577 = vmatpush.msra.mxu0 0.0
        %578 = vmatpush.msra.mxu0 0.0
        %579 = vmatpush.msra.mxu0 0.0
        %580 = vmatpush.msra.mxu0 0.0
        %581 = vmatpush.msra.mxu0 0.0
        %582 = vmatpush.msra.mxu0 0.0
        %583 = vmatpush.msra.mxu0 0.0
        %584 = vmatpush.msra.mxu0 %v571
        %585 = vmatpush.msra.mxu0 %v569
        %586 = vmatpush.msra.mxu0 %v567
        %587 = vmatpush.msra.mxu0 %v565
        %588 = vmatpush.msra.mxu0 %v563
        %589 = vmatpush.msra.mxu0 %v561
        %590 = vmatpush.msra.mxu0 %v559
        %591 = vmatpush.msra.mxu0 %v557
        %592 = vmatmul.f32.gmra.mxu0 %v574
        %v593 = vpop.f32.mrf.mxu0
        %v594 = vadd.f32 0.0, %v593
        %595 = vdwg.mxu0
        %596 = vmatpush.msra.mxu0 0.0
        %597 = vmatpush.msra.mxu0 0.0
        %598 = vmatpush.msra.mxu0 0.0
        %599 = vmatpush.msra.mxu0 0.0
        %600 = vmatpush.msra.mxu0 0.0
        %601 = vmatpush.msra.mxu0 0.0
        %602 = vmatpush.msra.mxu0 0.0
        %603 = vmatpush.msra.mxu0 0.0
        %604 = vmatpush.msra.mxu0 %v572
        %605 = vmatpush.msra.mxu0 %v570
        %606 = vmatpush.msra.mxu0 %v568
        %607 = vmatpush.msra.mxu0 %v566
        %608 = vmatpush.msra.mxu0 %v564
        %609 = vmatpush.msra.mxu0 %v562
        %610 = vmatpush.msra.mxu0 %v560
        %611 = vmatpush.msra.mxu0 %v558
        %612 = vmatmul.f32.gmra.mxu0 %v574
        %v613 = vpop.f32.mrf.mxu0
        %v614 = vadd.f32 0.0, %v613
        %615 = vdwg.mxu0
        %v618 = vrot.slane %v614, 4
        %v619 = vsel %vm380, %v594, %v618
        %v621 = vadd.f32 %v556, %v619
        %v622 = vxor.u32 %v621, 2147483648
        %v623 = vmul.f32 %v622, 1.442695
        %v624 = vpow.pop %v623
        %v625 = vadd.f32 %v624, 1.0
        %v626 = vrcp.pop %v625
        %v627 = vmul.f32 %v625, %v626
        %v628 = vsub.f32 1.0, %v627
        %v629 = vmul.f32 %v626, %v628
        %v630 = vadd.f32 %v626, %v629
        %vm631 = vweird.f32 %v625
        %vm632 = vweird.f32 %v626
        %vm633 = vmor %vm631, %vm632
        %v634 = vsel %vm633, %v626, %v630
        %v635 = vand.u32 2147483647, %v625
        %vm636 = vcmp.eq.f32.partialorder %v635, 8.507059e+37
        %v637 = vand.u32 %v625, 2147483648
        %v638 = vor.u32 1.1754944e-38, %v637
        %v639 = vsel %vm636, %v638, %v634
        %v640 = vmul.f32 1.0, %v639
        %642 = vrot.lane.b32.xlu0 %v621, 64
        %v643 = vpop.permute.xlu0 %642
        %v644 = vrot.slane %v643, 4
        %v646 = vtanh.pop %v644
        %v647 = vmul.f32 %v640, %v537
        %v648 = vmul.f32 %v640, %v646
        %650 = vrot.lane.b32.xlu0 %v648, 64
        %v651 = vpop.permute.xlu0 %650
        %v653 = vadd.f32 %v647, %v651
        %v654 = vtanh.pop %v653
        %v656 = vrot.slane %v640, 4
        %659 = vrot.lane.b32.xlu0 %v654, 64
        %v660 = vpop.permute.xlu0 %659
        %v662 = vmul.f32 %v656, %v660
        %s663 = smul.u32 %s554, 4
        %s664 = scalar_lea.vmem [#allocation12], %s663
        %665 = vst.msk [vmem:[%s664] sm:$0xf] %vm431, %v662
        %s666 = ssub.s32 5, %s313
        %s667 = smul.u32 %s666, 4
        %s668 = scalar_lea.vmem [#allocation12], %s667
        %669 = vst.msk [vmem:[%s668] sm:$0xf] %vm436, %v662
        %s670 = sadd.s32 %s313, 3
        %s671 = scalar_lea.vmem %s263, 24 [#allocation4]
        %v672 = vld [vmem:[%s671] sm:$0xff]
        %v673 = vld [vmem:[#allocation7] sm:$0xff]
        %v674 = vld [vmem:[#allocation7 + $0x8] sm:$0xff]
        %v675 = vld [vmem:[#allocation7 + $0x10] sm:$0xff]
        %v676 = vld [vmem:[#allocation7 + $0x18] sm:$0xff]
        %v677 = vld [vmem:[#allocation7 + $0x20] sm:$0xff]
        %v678 = vld [vmem:[#allocation7 + $0x28] sm:$0xff]
        %v679 = vld [vmem:[#allocation7 + $0x30] sm:$0xff]
        %v680 = vld [vmem:[#allocation7 + $0x38] sm:$0xff]
        %v681 = vld [vmem:[#allocation7 + $0x40] sm:$0xff]
        %v682 = vld [vmem:[#allocation7 + $0x48] sm:$0xff]
        %v683 = vld [vmem:[#allocation7 + $0x50] sm:$0xff]
        %v684 = vld [vmem:[#allocation7 + $0x58] sm:$0xff]
        %v685 = vld [vmem:[#allocation7 + $0x60] sm:$0xff]
        %v686 = vld [vmem:[#allocation7 + $0x68] sm:$0xff]
        %v687 = vld [vmem:[#allocation7 + $0x70] sm:$0xff]
        %v688 = vld [vmem:[#allocation7 + $0x78] sm:$0xff]
        %v690 = vsel %vm333, %v662, 0
        %692 = vmatpush.msra.mxu0 0.0
        %693 = vmatpush.msra.mxu0 0.0
        %694 = vmatpush.msra.mxu0 0.0
        %695 = vmatpush.msra.mxu0 0.0
        %696 = vmatpush.msra.mxu0 0.0
        %697 = vmatpush.msra.mxu0 0.0
        %698 = vmatpush.msra.mxu0 0.0
        %699 = vmatpush.msra.mxu0 0.0
        %700 = vmatpush.msra.mxu0 %v687
        %701 = vmatpush.msra.mxu0 %v685
        %702 = vmatpush.msra.mxu0 %v683
        %703 = vmatpush.msra.mxu0 %v681
        %704 = vmatpush.msra.mxu0 %v679
        %705 = vmatpush.msra.mxu0 %v677
        %706 = vmatpush.msra.mxu0 %v675
        %707 = vmatpush.msra.mxu0 %v673
        %708 = vmatmul.f32.gmra.mxu0 %v690
        %v709 = vpop.f32.mrf.mxu0
        %v710 = vadd.f32 0.0, %v709
        %711 = vdwg.mxu0
        %712 = vmatpush.msra.mxu0 0.0
        %713 = vmatpush.msra.mxu0 0.0
        %714 = vmatpush.msra.mxu0 0.0
        %715 = vmatpush.msra.mxu0 0.0
        %716 = vmatpush.msra.mxu0 0.0
        %717 = vmatpush.msra.mxu0 0.0
        %718 = vmatpush.msra.mxu0 0.0
        %719 = vmatpush.msra.mxu0 0.0
        %720 = vmatpush.msra.mxu0 %v688
        %721 = vmatpush.msra.mxu0 %v686
        %722 = vmatpush.msra.mxu0 %v684
        %723 = vmatpush.msra.mxu0 %v682
        %724 = vmatpush.msra.mxu0 %v680
        %725 = vmatpush.msra.mxu0 %v678
        %726 = vmatpush.msra.mxu0 %v676
        %727 = vmatpush.msra.mxu0 %v674
        %728 = vmatmul.f32.gmra.mxu0 %v690
        %v729 = vpop.f32.mrf.mxu0
        %v730 = vadd.f32 0.0, %v729
        %731 = vdwg.mxu0
        %v734 = vrot.slane %v730, 4
        %v735 = vsel %vm380, %v710, %v734
        %v737 = vadd.f32 %v672, %v735
        %v738 = vxor.u32 %v737, 2147483648
        %v739 = vmul.f32 %v738, 1.442695
        %v740 = vpow.pop %v739
        %v741 = vadd.f32 %v740, 1.0
        %v742 = vrcp.pop %v741
        %v743 = vmul.f32 %v741, %v742
        %v744 = vsub.f32 1.0, %v743
        %v745 = vmul.f32 %v742, %v744
        %v746 = vadd.f32 %v742, %v745
        %vm747 = vweird.f32 %v741
        %vm748 = vweird.f32 %v742
        %vm749 = vmor %vm747, %vm748
        %v750 = vsel %vm749, %v742, %v746
        %v751 = vand.u32 2147483647, %v741
        %vm752 = vcmp.eq.f32.partialorder %v751, 8.507059e+37
        %v753 = vand.u32 %v741, 2147483648
        %v754 = vor.u32 1.1754944e-38, %v753
        %v755 = vsel %vm752, %v754, %v750
        %v756 = vmul.f32 1.0, %v755
        %758 = vrot.lane.b32.xlu0 %v737, 64
        %v759 = vpop.permute.xlu0 %758
        %v760 = vrot.slane %v759, 4
        %v762 = vtanh.pop %v760
        %v763 = vmul.f32 %v756, %v653
        %v764 = vmul.f32 %v756, %v762
        %766 = vrot.lane.b32.xlu0 %v764, 64
        %v767 = vpop.permute.xlu0 %766
        %v769 = vadd.f32 %v763, %v767
        %v770 = vtanh.pop %v769
        %v772 = vrot.slane %v756, 4
        %775 = vrot.lane.b32.xlu0 %v770, 64
        %v776 = vpop.permute.xlu0 %775
        %v778 = vmul.f32 %v772, %v776
        %s779 = smul.u32 %s670, 4
        %s780 = scalar_lea.vmem [#allocation12], %s779
        %781 = vst.msk [vmem:[%s780] sm:$0xf] %vm431, %v778
        %s782 = ssub.s32 4, %s313
        %s783 = smul.u32 %s782, 4
        %s784 = scalar_lea.vmem [#allocation12], %s783
        %785 = vst.msk [vmem:[%s784] sm:$0xf] %vm436, %v778
        %vm786 = vcmask 519168
        %787 = vst.msk [vmem:[#allocation2] sm:$0xf] %vm786, %v778
        %789 = vst [vmem:[#allocation1] ss:$2 sm:$0xff] %v769
        %v790 = vld.sshfl [vmem:[#allocation1] sm:$0xff pattern:$0x75316420]
        %791 = vrot.lane.b32.xlu0 %v790, 64
        %v792 = vpop.permute.xlu0 %791
        %794 = vst.msk [vmem:[#allocation3] sm:$0xf] %vm786, %v792
        %p795 = scmp.eq.s32.totalorder %s25, 1
        // Predicated region
        $region57: #{tpu_custom_call.1} parent=35 // pred_check
          %p796 = pneg %p795
        $region58: #{tpu_custom_call.1} parent=35 // pred_check_branch
          %798 = sbr.rel (%p796) target = $region60
        $region59: #{tpu_custom_call.1} parent=35 // pred_region
          %799 = vst.msk [vmem:[#allocation13] sm:$0xf] %vm431, %v778
          %801 = vst [vmem:[#allocation1] ss:$2 sm:$0xff] %v778
          %v802 = vld.sshfl [vmem:[#allocation1] sm:$0xff pattern:$0x75316420]
          %803 = vrot.lane.b32.xlu0 %v802, 96
          %v804 = vpop.permute.xlu0 %803
          %s806 = scalar_lea.vmem [#allocation13], 4
          %807 = vst.msk [vmem:[%s806] sm:$0xf] %vm431, %v804
          %808 = vst [vmem:[#allocation1] ss:$2 sm:$0xff] %v769
          %v809 = vld.sshfl [vmem:[#allocation1] sm:$0xff pattern:$0x75316420]
          %810 = vrot.lane.b32.xlu0 %v809, 64
          %v811 = vpop.permute.xlu0 %810
          %813 = vst.msk [vmem:[#allocation15] sm:$0xf] %vm431, %v811
          %814 = vst [vmem:[#allocation1] ss:$2 sm:$0xff] %v769
          %v815 = vld.sshfl [vmem:[#allocation1] sm:$0xff pattern:$0x75316420]
          %816 = vrot.lane.b32.xlu0 %v815, 32
          %v817 = vpop.permute.xlu0 %816
          %s819 = scalar_lea.vmem [#allocation15], 4
          %820 = vst.msk [vmem:[%s819] sm:$0xf] %vm431, %v817
        $region60: #{tpu_custom_call.1} parent=35 // pred_fallthru
          _
        // Predicated region
        $region61: #{tpu_custom_call.1} parent=35 // pred_check
          %p821 = pneg %p127
        $region62: #{tpu_custom_call.1} parent=35 // pred_check_branch
          %823 = sbr.rel (%p821) target = $region64
        $region63: #{tpu_custom_call.1} parent=35 // pred_region
          %825 = vsyncadd [#allocation6], 0
          %s826 = sshll.u32 [#allocation12], 4
          %s827 = int_to_ptr.vmem [resolvable:$true] %s826
          %s828 = sshll.u32 %s4, 4
          %s829 = int_to_ptr.hbm [resolvable:$true] %s828
          %834 = dma.vmem_to_hbm [thread:$0]  %s827, 512, %s829, [#allocation6], 64, 64, 4
        $region64: #{tpu_custom_call.1} parent=35 // pred_fallthru
          _
        // Predicated region
        $region65: #{tpu_custom_call.1} parent=35 // pred_check
          %p835 = pneg %p148
        $region66: #{tpu_custom_call.1} parent=35 // pred_check_branch
          %837 = sbr.rel (%p835) target = $region68
        $region67: #{tpu_custom_call.1} parent=35 // pred_region
          %839 = vsyncadd [#allocation14], 0
          %s840 = sshll.u32 [#allocation13], 4
          %s841 = int_to_ptr.vmem [resolvable:$true] %s840
          %s842 = sshll.u32 %s5, 4
          %s843 = int_to_ptr.hbm [resolvable:$true] %s842
          %848 = dma.vmem_to_hbm [thread:$0]  %s841, 128, %s843, [#allocation14], 64, 64, 4
        $region68: #{tpu_custom_call.1} parent=35 // pred_fallthru
          _
        // Predicated region
        $region69: #{tpu_custom_call.1} parent=35 // pred_check
          %p849 = pneg %p169
        $region70: #{tpu_custom_call.1} parent=35 // pred_check_branch
          %851 = sbr.rel (%p849) target = $region72
        $region71: #{tpu_custom_call.1} parent=35 // pred_region
          %853 = vsyncadd [#allocation14], 0
          %s854 = sshll.u32 [#allocation15], 4
          %s855 = int_to_ptr.vmem [resolvable:$true] %s854
          %s856 = sshll.u32 %s6, 4
          %s857 = int_to_ptr.hbm [resolvable:$true] %s856
          %862 = dma.vmem_to_hbm [thread:$0]  %s855, 128, %s857, [#allocation14], 64, 64, 4
        $region72: #{tpu_custom_call.1} parent=35 // pred_fallthru
          _
        // Predicated region
        $region73: #{tpu_custom_call.1} parent=35 // pred_check
          %p863 = pneg %p127
        $region74: #{tpu_custom_call.1} parent=35 // pred_check_branch
          %865 = sbr.rel (%p863) target = $region76
        $region75: #{tpu_custom_call.1} parent=35 // pred_region
          %867 = dma.done [#allocation6], 512
        $region76: #{tpu_custom_call.1} parent=35 // pred_fallthru
          _
        // Predicated region
        $region77: #{tpu_custom_call.1} parent=35 // pred_check
          %p868 = pneg %p148
        $region78: #{tpu_custom_call.1} parent=35 // pred_check_branch
          %870 = sbr.rel (%p868) target = $region80
        $region79: #{tpu_custom_call.1} parent=35 // pred_region
          %872 = dma.done [#allocation14], 128
        $region80: #{tpu_custom_call.1} parent=35 // pred_fallthru
          _
        // Predicated region
        $region81: #{tpu_custom_call.1} parent=35 // pred_check
          %p873 = pneg %p169
        $region82: #{tpu_custom_call.1} parent=35 // pred_check_branch
          %875 = sbr.rel (%p873) target = $region84
        $region83: #{tpu_custom_call.1} parent=35 // pred_region
          %877 = dma.done [#allocation14], 128
        $region84: #{tpu_custom_call.1} parent=35 // pred_fallthru
          _
      $region36: #{tpu_custom_call.1} parent=5 // pred_fallthru
        _
      %p878 = scmp.le.s32.totalorder 2, %s20
      // Predicated region
      $region85: #{tpu_custom_call.1} parent=5 // pred_check
        %p879 = pneg %p878
      $region86: #{tpu_custom_call.1} parent=5 // pred_check_branch
        %881 = sbr.rel (%p879) target = $region88
      $region87: #{tpu_custom_call.1} parent=5 // pred_region
        %s882 = ssub.s32 %s20, 2
      $region88: #{tpu_custom_call.1} parent=5 // pred_fallthru
        _
    $region6: #{tpu_custom_call.1} parent=1 // loop_footer
      %s24 = sadd.s32 1, %s20
    $region7: #{tpu_custom_call.1} parent=1 // loop_footer_branch
      %19 = sbr.rel target = $region3
    $region8: #{tpu_custom_call.1} parent=1 // loop_exit
      _
    %883 = vsyncpa [#allocation5], 1
    %s884 = scalar_lea.sflag [#allocation5], 1
    %885 = vsyncpa %s884, 1
    %886 = vsyncpa [#allocation8], 1
    %887 = vsyncpa [#allocation11], 1
    %888 = vsyncpa [#allocation6], 1
    %s889 = scalar_lea.sflag [#allocation6], 1
    %890 = vsyncpa %s889, 1
    %891 = vsyncpa [#allocation14], 1

</llo_original>
